<compile_context>
chip_gen: v7x
topology: tpu7x:2x2x1
jax: 0.10.0
libtpu: 0.0.40
codegen_flags: <defaults>
</compile_context>

<pallas_src>
import functools

import jax
import jax.numpy as jnp
from jax.experimental import pallas as pl
from jax.experimental.pallas import tpu as pltpu


def _round_up(v, m):
    return ((v + m - 1) // m) * m


def _pick_tiles(c_in, l_in, lq, l_out, kk, stride, padding, itemsize):
    """Choose (channel tile, L-out tile, #L tiles, vmem estimate)."""

    def est(ct, tl):
        return (2 * stride * _round_up(ct, 8) * _round_up(lq, 128) * itemsize   # x block (2 bufs)
                + 2 * _round_up(ct, 8) * _round_up(tl, 128) * itemsize          # out block (2 bufs)
                + 2 * _round_up(ct, 8) * _round_up(kk, 128) * itemsize)         # w block (2 bufs)

    c_cands = [c for c in (64, 32, 16, 8) if c_in % c == 0] or [c_in]

    if l_out <= 128:
        l_order = [l_out]                                  # single (halo-aware) tile
    else:
        cands = [t for t in (512, 256, 128) if t <= l_out]
        exact = [t for t in cands if l_out % t == 0]       # prefer dense last tile
        l_order = exact + [t for t in cands if t not in exact]

    budget = 10 << 20                                      # safe on v5e/v6e/v7x defaults
    for tl in l_order:
        n_lt = -(-l_out // tl)
        if n_lt >= 3:
            # Interior tiles load without halo handling; their reads must stay
            # inside [0, l_in).  (Essentially always true: padding << tl*stride.)
            if padding > tl * stride:
                continue
            if ((n_lt - 1) * tl - 1) * stride + (kk - 1) - padding > l_in - 1:
                continue
        for ct in c_cands:
            acc_vregs = (-(-ct // 8)) * (_round_up(tl, 128) // 128)
            if acc_vregs <= 16 and est(ct, tl) <= budget:
                return ct, tl, n_lt, est(ct, tl)

    # Conservative fallback: one fully-static halo-aware L tile, smallest channel tile.
    ct, tl, n_lt = c_cands[-1], l_out, 1
    return ct, tl, n_lt, est(ct, tl)


def _dwconv1d_kernel(xs_ref, w_ref, o_ref, *, kk, stride, padding, tl, l_in, n_lt):
    # xs_ref: (1, stride, C_tile, LQ)  phase-split input, resident across m & L tiles
    # w_ref:  (1, C_tile, K)           taps of output channel ci*mult + m
    # o_ref:  (1, 1, C_tile, TL)       one output-length tile (dense lane stores)
    c_t = o_ref.shape[2]
    l_idx = pl.program_id(3)
    w = w_ref[0].astype(jnp.float32)                       # cast once per grid step

    # Static per-tap decimated coordinates:
    #   input position for output o at tap k: s = o*stride + k - padding
    #   s = q*stride + r with r = (k-padding) % stride, q = o + (k-padding)//stride
    taps = []
    for k in range(kk):
        d = k - padding
        q_off = d // stride                                # python floor div
        r = d % stride                                     # in [0, stride)
        q_hi = (l_in - 1 - r) // stride if r <= l_in - 1 else -1
        taps.append((k, r, q_off, q_hi))

    def accumulate(out0, halo):
        """out0: first output index of this tile (python int iff halo)."""
        acc = jnp.zeros((c_t, tl), jnp.float32)
        for k, r, q_off, q_hi in taps:
            wk = w[:, k:k + 1]                             # (C_tile, 1) lane splat
            if halo:                                       # fully static offsets
                q0 = out0 + q_off
                lo = max(0, -q0)                           # leading zero-pad outputs
                hi = min(tl, q_hi - q0 + 1)                # trailing zero-pad outputs
                if hi <= lo:
                    continue                               # tap reads only padding
                seg = xs_ref[0, r, :, q0 + lo:q0 + hi].astype(jnp.float32) * wk
                if lo == 0 and hi == tl:
                    acc = acc + seg
                else:
                    parts = []
                    if lo:
                        parts.append(jnp.zeros((c_t, lo), jnp.float32))
                    parts.append(seg)
                    if tl - hi:
                        parts.append(jnp.zeros((c_t, tl - hi), jnp.float32))
                    acc = acc + jnp.concatenate(parts, axis=-1)
            else:                                          # interior tile: in-bounds by construction
                q0 = out0 + q_off
                seg = xs_ref[0, r, :, pl.ds(q0, tl)].astype(jnp.float32) * wk
                acc = acc + seg
        o_ref[0, 0] = acc.astype(o_ref.dtype)

    if n_lt == 1:
        accumulate(0, True)
    else:
        @pl.when(l_idx == 0)
        def _first():
            accumulate(0, True)

        @pl.when(l_idx == n_lt - 1)
        def _last():
            accumulate((n_lt - 1) * tl, True)

        if n_lt > 2:
            @pl.when((l_idx > 0) & (l_idx < n_lt - 1))
            def _interior():
                base = l_idx * tl
                if tl % 128 == 0:
                    base = pl.multiple_of(base, 128)
                accumulate(base, False)


def depthwise_conv1d(x, weight, bias=None, *, stride=1, padding=0):
    """Depthwise conv1d matching torch.nn.Conv1d(groups=in_channels).

    x: (B, C_in, L), weight: (C_out, 1, K) with C_out = mult*C_in.
    Returns (B, C_out, L_out), L_out = (L + 2*padding - K)//stride + 1.
    """
    b, c_in, l_in = x.shape
    c_out, wic, kk = weight.shape
    assert wic == 1 and c_out % c_in == 0, "expects depthwise weight (C_out, 1, K)"
    mult = c_out // c_in
    assert stride >= 1 and padding >= 0
    l_out = (l_in + 2 * padding - kk) // stride + 1
    assert l_out > 0, "empty output"

    lq = -(-l_in // stride)
    c_t, tl, n_lt, vmem_est = _pick_tiles(
        c_in, l_in, lq, l_out, kk, stride, padding, x.dtype.itemsize)

    # Phase-split input so every tap load is a dense contiguous lane slice even
    # for stride > 1:  xs[b, r, c, q] = x[b, c, q*stride + r].
    if stride == 1:
        xs = x[:, None, :, :]                              # free (metadata reshape)
    else:
        pad_tail = lq * stride - l_in
        xp = jnp.pad(x, ((0, 0), (0, 0), (0, pad_tail))) if pad_tail else x
        xs = xp.reshape(b, c_in, lq, stride).transpose(0, 3, 1, 2)

    # Rearrange weights so w3[m, ci] are the taps of output channel ci*mult + m.
    w3 = weight[:, 0, :].reshape(c_in, mult, kk).transpose(1, 0, 2)

    kernel = functools.partial(_dwconv1d_kernel, kk=kk, stride=stride,
                               padding=padding, tl=tl, l_in=l_in, n_lt=n_lt)

    cp = dict(dimension_semantics=("parallel", "parallel", "parallel", "parallel"))
    if vmem_est > (12 << 20):
        # Generation-aware: exceeds v5e's 16 MiB default scoped VMEM; cap under
        # v7x's 64 MiB physical VMEM.
        cp["vmem_limit_bytes"] = min(int(vmem_est * 1.25) + (2 << 20), 56 << 20)

    out4 = pl.pallas_call(
        kernel,
        out_shape=jax.ShapeDtypeStruct((b, mult, c_in, l_out), x.dtype),
        grid_spec=pltpu.PrefetchScalarGridSpec(
            num_scalar_prefetch=0,
            grid=(b, c_in // c_t, mult, n_lt),
            in_specs=[
                # x block constant along (m, l): DMA'd once per (batch, channel tile)
                pl.BlockSpec((1, stride, c_t, lq), lambda i, j, m, l: (i, 0, j, 0)),
                pl.BlockSpec((1, c_t, kk), lambda i, j, m, l: (m, j, 0)),
            ],
            out_specs=pl.BlockSpec((1, 1, c_t, tl), lambda i, j, m, l: (i, m, j, l)),
        ),
        compiler_params=pltpu.CompilerParams(**cp),
        cost_estimate=pl.CostEstimate(
            flops=2 * b * c_out * l_out * kk,
            transcendentals=0,
            bytes_accessed=(x.size * x.dtype.itemsize
                            + w3.size * w3.dtype.itemsize
                            + b * c_out * l_out * x.dtype.itemsize)),
    )(xs, w3)

    if mult == 1:
        out = out4.reshape(b, c_out, l_out)                # free reshape
    else:
        # (B, mult, C_in, L) -> (B, C_in, mult, L) -> (B, C_out, L): torch order.
        out = out4.transpose(0, 2, 1, 3).reshape(b, c_out, l_out)
    if bias is not None:
        out = out + bias[None, :, None]
    return out


def _reference(x, weight, stride, padding):
    return jax.lax.conv_general_dilated(
        x, weight, window_strides=(stride,), padding=[(padding, padding)],
        dimension_numbers=("NCH", "OIH", "NCH"), feature_group_count=x.shape[1])


if __name__ == "__main__":
    key = jax.random.PRNGKey(0)
    k1, k2, k3, k4, k5, k6 = jax.random.split(key, 6)
    ok = True

    # 1) Module-default small case: in=4, out=8 (mult=2), K=3, stride=1, pad=1.
    x1 = jax.random.normal(k1, (2, 4, 16), dtype=jnp.float32)
    w1 = jax.random.normal(k2, (8, 1, 3), dtype=jnp.float32) * 0.1
    o1 = jax.block_until_ready(depthwise_conv1d(x1, w1, stride=1, padding=1))
    r1 = _reference(x1, w1, 1, 1)
    ok &= o1.shape == r1.shape and bool(jnp.allclose(o1, r1, atol=1e-4, rtol=1e-4))

    # 2) Conformer-like: K=31, pad=15, multi-tile L (first / interior / last tiles).
    x2 = jax.random.normal(k3, (2, 16, 384), dtype=jnp.float32)
    w2 = jax.random.normal(k4, (16, 1, 31), dtype=jnp.float32) * 0.1
    o2 = jax.block_until_ready(depthwise_conv1d(x2, w2, stride=1, padding=15))
    r2 = _reference(x2, w2, 1, 15)
    ok &= o2.shape == r2.shape and bool(jnp.allclose(o2, r2, atol=1e-4, rtol=1e-4))

    # 3) Strided case with a clipped last L tile: stride=2, L_out=257.
    x3 = jax.random.normal(k5, (1, 8, 514), dtype=jnp.float32)
    w3 = jax.random.normal(k6, (8, 1, 3), dtype=jnp.float32) * 0.1
    o3 = jax.block_until_ready(depthwise_conv1d(x3, w3, stride=2, padding=1))
    r3 = _reference(x3, w3, 2, 1)
    ok &= o3.shape == r3.shape and bool(jnp.allclose(o3, r3, atol=1e-4, rtol=1e-4))

    assert ok, "mismatch vs reference grouped conv"
    print("KERNEL_OK")
</pallas_src>

<mosaic_0001>
module attributes {stable_mosaic.version = 11 : i64} {
  func.func @_dwconv1d_kernel(%arg0: i32, %arg1: i32, %arg2: i32, %arg3: i32, %arg4: memref<1x1x4x16xf32, #tpu.memory_space<vmem>>, %arg5: memref<1x4x3xf32, #tpu.memory_space<vmem>>, %arg6: memref<1x1x4x16xf32, #tpu.memory_space<vmem>>) attributes {dimension_semantics = [#tpu.dimension_semantics<parallel>, #tpu.dimension_semantics<parallel>, #tpu.dimension_semantics<parallel>, #tpu.dimension_semantics<parallel>], iteration_bounds = array<i64: 2, 1, 2, 1>, scalar_prefetch = 0 : i64, scratch_operands = 0 : i64, tpu.core_type = #tpu.core_type<tc>, window_params = [{transform_indices = @transform_0, window_bounds = array<i64: 1, 1, 4, 16>}, {transform_indices = @transform_1, window_bounds = array<i64: 1, 4, 3>}, {transform_indices = @transform_2, window_bounds = array<i64: 1, 1, 4, 16>}]} {
    %c0 = arith.constant 0 : index
    %c0_0 = arith.constant 0 : index
    %c0_1 = arith.constant 0 : index
    %0 = vector.load %arg5[%c0, %c0_0, %c0_1] : memref<1x4x3xf32, #tpu.memory_space<vmem>>, vector<1x4x3xf32>
    %1 = vector.shape_cast %0 : vector<1x4x3xf32> to vector<4x3xf32>
    %cst = arith.constant 0.000000e+00 : f32
    %2 = vector.broadcast %cst : f32 to vector<4x16xf32>
    %3 = vector.extract_strided_slice %1 {offsets = [0, 0], sizes = [4, 1], strides = [1, 1]} : vector<4x3xf32> to vector<4x1xf32>
    %c0_2 = arith.constant 0 : index
    %c0_3 = arith.constant 0 : index
    %c0_4 = arith.constant 0 : index
    %c0_5 = arith.constant 0 : index
    %4 = vector.load %arg4[%c0_2, %c0_3, %c0_4, %c0_5] : memref<1x1x4x16xf32, #tpu.memory_space<vmem>>, vector<1x1x4x15xf32>
    %5 = vector.shape_cast %4 : vector<1x1x4x15xf32> to vector<4x15xf32>
    %6 = vector.broadcast %3 : vector<4x1xf32> to vector<4x15xf32>
    %7 = arith.mulf %5, %6 : vector<4x15xf32>
    %cst_6 = arith.constant 0.000000e+00 : f32
    %8 = vector.broadcast %cst_6 : f32 to vector<4x1xf32>
    %9 = tpu.concatenate %8, %7 in 1 : vector<4x1xf32>, vector<4x15xf32> -> vector<4x16xf32>
    %10 = arith.addf %2, %9 : vector<4x16xf32>
    %11 = vector.extract_strided_slice %1 {offsets = [0, 1], sizes = [4, 1], strides = [1, 1]} : vector<4x3xf32> to vector<4x1xf32>
    %c0_7 = arith.constant 0 : index
    %c0_8 = arith.constant 0 : index
    %c0_9 = arith.constant 0 : index
    %c0_10 = arith.constant 0 : index
    %12 = vector.load %arg4[%c0_7, %c0_8, %c0_9, %c0_10] : memref<1x1x4x16xf32, #tpu.memory_space<vmem>>, vector<1x1x4x16xf32>
    %13 = vector.shape_cast %12 : vector<1x1x4x16xf32> to vector<4x16xf32>
    %14 = vector.broadcast %11 : vector<4x1xf32> to vector<4x16xf32>
    %15 = arith.mulf %13, %14 : vector<4x16xf32>
    %16 = arith.addf %10, %15 : vector<4x16xf32>
    %17 = vector.extract_strided_slice %1 {offsets = [0, 2], sizes = [4, 1], strides = [1, 1]} : vector<4x3xf32> to vector<4x1xf32>
    %c0_11 = arith.constant 0 : index
    %c0_12 = arith.constant 0 : index
    %c0_13 = arith.constant 0 : index
    %c1 = arith.constant 1 : index
    %18 = vector.load %arg4[%c0_11, %c0_12, %c0_13, %c1] : memref<1x1x4x16xf32, #tpu.memory_space<vmem>>, vector<1x1x4x15xf32>
    %19 = vector.shape_cast %18 : vector<1x1x4x15xf32> to vector<4x15xf32>
    %20 = vector.broadcast %17 : vector<4x1xf32> to vector<4x15xf32>
    %21 = arith.mulf %19, %20 : vector<4x15xf32>
    %cst_14 = arith.constant 0.000000e+00 : f32
    %22 = vector.broadcast %cst_14 : f32 to vector<4x1xf32>
    %23 = tpu.concatenate %21, %22 in 1 : vector<4x15xf32>, vector<4x1xf32> -> vector<4x16xf32>
    %24 = arith.addf %16, %23 : vector<4x16xf32>
    %c0_15 = arith.constant 0 : index
    %c0_16 = arith.constant 0 : index
    %c0_17 = arith.constant 0 : index
    %c0_18 = arith.constant 0 : index
    %25 = vector.load %arg6[%c0_15, %c0_16, %c0_17, %c0_18] : memref<1x1x4x16xf32, #tpu.memory_space<vmem>>, vector<1x1x4x16xf32>
    %26 = vector.shape_cast %25 : vector<1x1x4x16xf32> to vector<4x16xf32>
    %27 = vector.shape_cast %24 : vector<4x16xf32> to vector<1x1x4x16xf32>
    tpu.vector_store %arg6[%c0_15, %c0_16, %c0_17, %c0_18], %27 {strides = array<i32>} : memref<1x1x4x16xf32, #tpu.memory_space<vmem>>, vector<1x1x4x16xf32>,
    return
  }
  func.func @transform_0(%arg0: i32, %arg1: i32, %arg2: i32, %arg3: i32) -> (i32, i32, i32, i32) {
    %c0_i32 = arith.constant 0 : i32
    %c0_i32_0 = arith.constant 0 : i32
    %c0_i32_1 = arith.constant 0 : i32
    return %arg0, %c0_i32, %arg1, %c0_i32_0 : i32, i32, i32, i32
  }
  func.func @transform_1(%arg0: i32, %arg1: i32, %arg2: i32, %arg3: i32) -> (i32, i32, i32) {
    %c0_i32 = arith.constant 0 : i32
    %c0_i32_0 = arith.constant 0 : i32
    return %arg2, %arg1, %c0_i32 : i32, i32, i32
  }
  func.func @transform_2(%arg0: i32, %arg1: i32, %arg2: i32, %arg3: i32) -> (i32, i32, i32, i32) {
    %c0_i32 = arith.constant 0 : i32
    return %arg0, %arg2, %arg1, %arg3 : i32, i32, i32, i32
  }
}

</mosaic_0001>

<llo_original>
// kernel: tpu_custom_call.1
$region0: #{tpu_custom_call.1}
  #allocation0 [shape = 'u32[]', space=smem, size = 0x4, offset = 0x4, fixed_abs, tag = 'smem constant byte address 0x4 - core index']
  #allocation1 [shape = 'u32[144,128]{1,0:T(1,128)}', space=vmem, size = 0x12000, scoped, tag = 'internal scratch']
  %s0 = inlined_call_operand.vmem [shape: f32[2,1,4,16], index: 0, kind: input, shape index: {}]
  %s1 = inlined_call_operand.vmem [shape: f32[2,4,3], index: 1, kind: input, shape index: {}]
  %s2 = inlined_call_operand.hbm [shape: f32[2,2,4,16], index: 2, kind: output, shape index: {}]
  %s3 = sld [smem:[#allocation0]]
  $region41: #{tpu_custom_call.1} parent=0
    _
  %s5 = ssub.s32 1, %s3
  %s6 = scalar_select 0, %s5, %s3
  $region1: #{tpu_custom_call.1} parent=0
    #allocation2 [shape = 'u8[4096]{0}', space=vmem, size = 0x1000, scoped, tag = 'output window, operand 0']
    #allocation3 [shape = 's32[2]{0}', space=sflag, size = 0x8, scoped, tag = 'scoped memory for tpu_custom_call.1']
    %7 = vsyncpa [#allocation3], 0
    %s8 = scalar_lea.sflag [#allocation3], 1
    %9 = vsyncpa %s8, 0
    loop: start=0, step=1, limit=6
    $region2: #{tpu_custom_call.1} parent=1 // loop_pre_header
      _
    $region3: #{tpu_custom_call.1} parent=1 // loop_header
      %s11 = sphi 0, %s15
      %p12 = scmp.ge.s32.totalorder %s11, 6
      %s18 = sphi 0, %s44
      %s19 = sphi 0, %s40
      %s20 = sphi 0, %s36
      %s21 = sphi 0, %s32
      %s22 = sphi 0, %s18
      %s23 = sphi 0, %s19
      %s24 = sphi 0, %s20
      %s25 = sphi 0, %s21
      %s26 = sphi 0, %s22
      %s27 = sphi 0, %s23
      %s28 = sphi 0, %s24
      %s29 = sphi 0, %s25
      %s49 = sphi 0, %s51
      %s52 = sphi 0, %s49
      %s53 = sphi 0, %s52
      %s69 = sphi 0, %s53
      %s77 = sphi 0, %s79
      %s80 = sphi 0, %s77
      %s81 = sphi 0, %s80
      %s97 = sphi 0, %s81
      %s109 = sphi 0, %s111
      %s112 = sphi 0, %s109
      %s113 = sphi 0, %s112
      %s129 = sphi 0, %s113
    $region4: #{tpu_custom_call.1} parent=1 // loop_header_branch
      %14 = sbr.rel (%p12) target = $region8
    $region5: #{tpu_custom_call.1} parent=1 // loop_body
      %s16 = ssub.s32 %s11, 1
      %s17 = ssub.s32 %s11, 2
      %s30 = sadd.s32 1, %s21
      %p31 = scmp.ge.s32.totalorder %s30, 1
      %s32 = scalar_select %p31, 0, %s30
      %s33 = sadd.s32 1, %s20
      %s34 = scalar_select %p31, %s33, %s20
      %p35 = scmp.ge.s32.totalorder %s34, 2
      %s36 = scalar_select %p35, 0, %s34
      %s37 = sadd.s32 1, %s19
      %s38 = scalar_select %p35, %s37, %s19
      %p39 = scmp.ge.s32.totalorder %s38, 1
      %s40 = scalar_select %p39, 0, %s38
      %s41 = sadd.s32 1, %s18
      %s42 = scalar_select %p39, %s41, %s18
      %p43 = scmp.ge.s32.totalorder %s42, 2
      %s44 = scalar_select %p43, 0, %s42
      %s45 = ssub.s32 %s18, %s44
      %s46 = ssub.s32 %s19, %s40
      %s47 = sor.u32 %s45, %s46
      %p48 = scmp.eq.s32.totalorder %s47, 0
      %s50 = sadd.s32 %s49, 1
      %s51 = scalar_select %p48, %s49, %s50
      %p54 = pneg %p48
      %p55 = scmp.eq.s32.totalorder %s11, 3
      %p56 = por %p54, %p55
      %p57 = scmp.ne.s32.totalorder %s49, %s52
      %p58 = scmp.eq.s32.totalorder %s11, 0
      %p59 = por %p57, %p58
      %p60 = scmp.ne.s32.totalorder %s49, %s52
      %p61 = scmp.eq.s32.totalorder %s16, 3
      %p62 = por %p60, %p61
      %p63 = scmp.ne.s32.totalorder %s52, %s53
      %p64 = scmp.eq.s32.totalorder %s16, 0
      %p65 = por %p63, %p64
      %p66 = scmp.ne.s32.totalorder %s52, %s53
      %p67 = scmp.eq.s32.totalorder %s17, 3
      %p68 = por %p66, %p67
      %p70 = scmp.ne.s32.totalorder %s53, %s69
      %p71 = scmp.eq.s32.totalorder %s17, 0
      %p72 = por %p70, %p71
      %s73 = ssub.s32 %s20, %s36
      %s74 = ssub.s32 %s19, %s40
      %s75 = sor.u32 %s73, %s74
      %p76 = scmp.eq.s32.totalorder %s75, 0
      %s78 = sadd.s32 %s77, 1
      %s79 = scalar_select %p76, %s77, %s78
      %p82 = pneg %p76
      %p83 = scmp.eq.s32.totalorder %s11, 3
      %p84 = por %p82, %p83
      %p85 = scmp.ne.s32.totalorder %s77, %s80
      %p86 = scmp.eq.s32.totalorder %s11, 0
      %p87 = por %p85, %p86
      %p88 = scmp.ne.s32.totalorder %s77, %s80
      %p89 = scmp.eq.s32.totalorder %s16, 3
      %p90 = por %p88, %p89
      %p91 = scmp.ne.s32.totalorder %s80, %s81
      %p92 = scmp.eq.s32.totalorder %s16, 0
      %p93 = por %p91, %p92
      %p94 = scmp.ne.s32.totalorder %s80, %s81
      %p95 = scmp.eq.s32.totalorder %s17, 3
      %p96 = por %p94, %p95
      %p98 = scmp.ne.s32.totalorder %s81, %s97
      %p99 = scmp.eq.s32.totalorder %s17, 0
      %p100 = por %p98, %p99
      %s101 = ssub.s32 %s18, %s44
      %s102 = ssub.s32 %s20, %s36
      %s103 = sor.u32 %s101, %s102
      %s104 = ssub.s32 %s19, %s40
      %s105 = sor.u32 %s103, %s104
      %s106 = ssub.s32 %s21, %s32
      %s107 = sor.u32 %s105, %s106
      %p108 = scmp.eq.s32.totalorder %s107, 0
      %s110 = sadd.s32 %s109, 1
      %s111 = scalar_select %p108, %s109, %s110
      %p114 = pneg %p108
      %p115 = scmp.eq.s32.totalorder %s11, 3
      %p116 = por %p114, %p115
      %p117 = scmp.ne.s32.totalorder %s109, %s112
      %p118 = scmp.eq.s32.totalorder %s11, 0
      %p119 = por %p117, %p118
      %p120 = scmp.ne.s32.totalorder %s109, %s112
      %p121 = scmp.eq.s32.totalorder %s16, 3
      %p122 = por %p120, %p121
      %p123 = scmp.ne.s32.totalorder %s112, %s113
      %p124 = scmp.eq.s32.totalorder %s16, 0
      %p125 = por %p123, %p124
      %p126 = scmp.ne.s32.totalorder %s112, %s113
      %p127 = scmp.eq.s32.totalorder %s17, 3
      %p128 = por %p126, %p127
      %p130 = scmp.ne.s32.totalorder %s113, %s129
      %p131 = scmp.eq.s32.totalorder %s17, 0
      %p132 = por %p130, %p131
      %p133 = scmp.le.s32.totalorder 1, %s11
      %p134 = scmp.lt.s32.totalorder %s11, 5
      %p135 = pnand %p133, %p134
      %p136 = pneg %p135
      // Predicated region
      $region9: #{tpu_custom_call.1} parent=5 // pred_check
        _
      $region10: #{tpu_custom_call.1} parent=5 // pred_check_branch
        %138 = sbr.rel (%p135) target = $region12
      $region11: #{tpu_custom_call.1} parent=5 // pred_region
        %s139 = ssub.s32 %s11, 1
      $region12: #{tpu_custom_call.1} parent=5 // pred_fallthru
        _
      %p140 = scmp.lt.s32.totalorder %s11, 4
      // Predicated region
      $region13: #{tpu_custom_call.1} parent=5 // pred_check
        %p141 = pneg %p140
      $region14: #{tpu_custom_call.1} parent=5 // pred_check_branch
        %143 = sbr.rel (%p141) target = $region16
      $region15: #{tpu_custom_call.1} parent=5 // pred_region
        // Predicated region
        $region17: #{tpu_custom_call.1} parent=15 // pred_check
          %p144 = pneg %p59
        $region18: #{tpu_custom_call.1} parent=15 // pred_check_branch
          %146 = sbr.rel (%p144) target = $region20
        $region19: #{tpu_custom_call.1} parent=15 // pred_region
          %p147 = scmp.lt.s32.totalorder %s18, 1
          %s148 = scalar_select %p147, %s18, 1
          %p149 = scmp.lt.s32.totalorder %s19, 0
          %s150 = scalar_select %p149, %s19, 0
          %s151 = sadd.s32 %s150, %s148
          %s152 = smul.addr %s151, 4
          %s153 = scalar_lea.vmem %s0, %s152
        $region20: #{tpu_custom_call.1} parent=15 // pred_fallthru
          _
        // Predicated region
        $region21: #{tpu_custom_call.1} parent=15 // pred_check
          %p154 = pneg %p87
        $region22: #{tpu_custom_call.1} parent=15 // pred_check_branch
          %156 = sbr.rel (%p154) target = $region24
        $region23: #{tpu_custom_call.1} parent=15 // pred_region
          %p157 = scmp.lt.s32.totalorder %s20, 1
          %s158 = scalar_select %p157, %s20, 1
          %p159 = scmp.lt.s32.totalorder %s19, 0
          %s160 = scalar_select %p159, %s19, 0
          %s161 = sadd.s32 %s160, %s158
          %s162 = smul.addr %s161, 4
          %s163 = scalar_lea.vmem %s1, %s162
        $region24: #{tpu_custom_call.1} parent=15 // pred_fallthru
          _
      $region16: #{tpu_custom_call.1} parent=5 // pred_fallthru
        _
      %p164 = scmp.le.s32.totalorder 1, %s11
      %p165 = scmp.lt.s32.totalorder %s11, 5
      %p166 = pnand %p164, %p165
      %p167 = pneg %p166
      // Predicated region
      $region25: #{tpu_custom_call.1} parent=5 // pred_check
        _
      $region26: #{tpu_custom_call.1} parent=5 // pred_check_branch
        %169 = sbr.rel (%p166) target = $region28
      $region27: #{tpu_custom_call.1} parent=5 // pred_region
        %s170 = ssub.s32 %s11, 1
        %p171 = scmp.lt.s32.totalorder %s22, 1
        %s172 = scalar_select %p171, %s22, 1
        %p173 = scmp.lt.s32.totalorder %s23, 0
        %s174 = scalar_select %p173, %s23, 0
        %s175 = sadd.s32 %s174, %s172
        %s176 = smul.addr %s175, 4
        %s177 = scalar_lea.vmem %s0, %s176
        %p178 = pneg %p65
        %p179 = pneg %p62
        %p180 = scmp.lt.s32.totalorder %s24, 1
        %s181 = scalar_select %p180, %s24, 1
        %p182 = scmp.lt.s32.totalorder %s23, 0
        %s183 = scalar_select %p182, %s23, 0
        %s184 = sadd.s32 %s183, %s181
        %s185 = smul.addr %s184, 4
        %s186 = scalar_lea.vmem %s1, %s185
        %p187 = pneg %p93
        %p188 = pneg %p90
        %p189 = pneg %p125
        %p190 = pneg %p122
        %s191 = sand.u32 %s112, 1
        %s192 = scalar_lea.sflag [#allocation3], %s191
        %s193 = sand.u32 %s112, 1
        %s194 = smul.addr %s193, 4
        %s195 = scalar_lea.vmem [#allocation2], %s194
        %p196 = scmp.lt.s32.totalorder %s22, 1
        %s197 = scalar_select %p196, %s22, 1
        %p198 = scmp.lt.s32.totalorder %s23, 0
        %s199 = scalar_select %p198, %s23, 0
        %s200 = sadd.s32 %s199, %s197
        %s201 = smul.addr %s200, 4
        %s202 = scalar_lea.vmem %s0, %s201
        %p203 = scmp.lt.s32.totalorder %s24, 1
        %s204 = scalar_select %p203, %s24, 1
        %p205 = scmp.lt.s32.totalorder %s23, 0
        %s206 = scalar_select %p205, %s23, 0
        %s207 = sadd.s32 %s206, %s204
        %s208 = smul.addr %s207, 4
        %s209 = scalar_lea.vmem %s1, %s208
        %v210 = vld [vmem:[%s209] sm:$0xf]
        %v211 = vld [vmem:[%s202] sm:$0xf]
        %213 = vset.pattern.permute.xlu0 0
        %214 = vperm.xlu0 %213, %v210
        %v215 = vpop.permute.xlu0 %214
        %v217 = vmul.f32 %v211, %v215
        %219 = vrot.lane.b32.xlu0 %v217, 1
        %v220 = vpop.permute.xlu0 %219
        %vm222 = vcmask 7168
        %v223 = vsel %vm222, 0.0, %v220
        %v224 = vadd.f32 %v223, 0.0
        %225 = vset.pattern.permute.xlu0 1
        %226 = vperm.xlu0 %225, %v210
        %v227 = vpop.permute.xlu0 %226
        %v229 = vmul.f32 %v211, %v227
        %v230 = vadd.f32 %v224, %v229
        %231 = vset.pattern.permute.xlu0 2
        %232 = vperm.xlu0 %231, %v210
        %v233 = vpop.permute.xlu0 %232
        %v235 = vmul.f32 %v211, %v233
        %237 = vrot.lane.b32.xlu0 %v235, 127
        %v238 = vpop.permute.xlu0 %237
        %vm240 = vcmask 121856
        %v241 = vsel %vm240, %v238, 0.0
        %v242 = vadd.f32 %v230, %v241
        %vm243 = vcmask 125952
        %244 = vst.msk [vmem:[%s195] sm:$0xf] %vm243, %v242
        %s245 = sand.u32 %s112, 1
        %s246 = scalar_lea.sflag [#allocation3], %s245
        %s247 = sand.u32 %s112, 1
        %s248 = smul.addr %s247, 4
        %s249 = scalar_lea.vmem [#allocation2], %s248
        // Predicated region
        $region29: #{tpu_custom_call.1} parent=27 // pred_check
          %p250 = pneg %p122
        $region30: #{tpu_custom_call.1} parent=27 // pred_check_branch
          %252 = sbr.rel (%p250) target = $region32
        $region31: #{tpu_custom_call.1} parent=27 // pred_region
          %s254 = ssub.s32 64, 64
          %255 = vsyncadd %s246, %s254
          %s256 = sadd.s32 %s25, %s23
          %s257 = sadd.s32 %s256, %s24
          %s258 = smul.addr %s22, 2
          %s259 = sadd.s32 %s257, %s258
          %s260 = smul.addr %s259, 64
          %s261 = scalar_lea.hbm %s2, %s260
          %s263 = sshll.u32 %s249, 4
          %s264 = int_to_ptr.vmem [resolvable:$true] %s263
          %266 = dma.vmem_to_hbm [thread:$0]  %s264, 64, %s261, %s246
        $region32: #{tpu_custom_call.1} parent=27 // pred_fallthru
          _
      $region28: #{tpu_custom_call.1} parent=5 // pred_fallthru
        _
      %p267 = scmp.le.s32.totalorder 2, %s11
      // Predicated region
      $region33: #{tpu_custom_call.1} parent=5 // pred_check
        %p268 = pneg %p267
      $region34: #{tpu_custom_call.1} parent=5 // pred_check_branch
        %270 = sbr.rel (%p268) target = $region36
      $region35: #{tpu_custom_call.1} parent=5 // pred_region
        %s271 = ssub.s32 %s11, 2
        // Predicated region
        $region37: #{tpu_custom_call.1} parent=35 // pred_check
          %p272 = pneg %p128
        $region38: #{tpu_custom_call.1} parent=35 // pred_check_branch
          %274 = sbr.rel (%p272) target = $region40
        $region39: #{tpu_custom_call.1} parent=35 // pred_region
          %s275 = sand.u32 %s113, 1
          %s276 = scalar_lea.sflag [#allocation3], %s275
          %s277 = sand.u32 %s113, 1
          %s278 = smul.addr %s277, 4
          %s279 = scalar_lea.vmem [#allocation2], %s278
          %280 = dma.done %s276, 64
        $region40: #{tpu_custom_call.1} parent=35 // pred_fallthru
          _
      $region36: #{tpu_custom_call.1} parent=5 // pred_fallthru
        _
    $region6: #{tpu_custom_call.1} parent=1 // loop_footer
      %s15 = sadd.s32 1, %s11
    $region7: #{tpu_custom_call.1} parent=1 // loop_footer_branch
      %10 = sbr.rel target = $region3
    $region8: #{tpu_custom_call.1} parent=1 // loop_exit
      _
    %281 = vsyncpa [#allocation3], 1
    %s282 = scalar_lea.sflag [#allocation3], 1
    %283 = vsyncpa %s282, 1

</llo_original>
